<compile_context>
chip_gen: v5e
topology: v5e:2x2
jax: 0.10.0
libtpu: 0.0.40
codegen_flags: <defaults>
</compile_context>

<pallas_src>
import jax
import jax.numpy as jnp
from jax.experimental import pallas as pl
from jax.experimental.pallas import tpu as pltpu

EMBD_DIM = 32
HIDDEN_DIM = 4 * EMBD_DIM        # 128 -> already lane-dense
SEQ_LEN = 8
BATCH = 2
LANE = 128


def ffn_kernel(x_ref, w1_ref, w2_ref, bias_ref, o_ref):
    """x_ref: (N, C) f32; w1_ref: (C, H) bf16; w2_ref: (H, Cp) bf16 (zero-padded);
    bias_ref: (2, max(H, Cp)) f32 (row 0 = b1, row 1 = b2 zero-padded); o_ref: (N, Cp)."""
    H = w1_ref.shape[1]
    Cp = w2_ref.shape[1]

    x = x_ref[...].astype(jnp.bfloat16)                                   # (N, C)

    # Linear(embd -> hidden) + ReLU   (bf16 operands, f32 accumulate)
    h = jnp.dot(x, w1_ref[...], preferred_element_type=jnp.float32)      # (N, H)
    h = h + bias_ref[0:1, :H]
    h = jnp.maximum(h, 0.0)

    # Linear(hidden -> embd), output padded to Cp lanes (cols >= C are zeros)
    y = jnp.dot(h.astype(jnp.bfloat16), w2_ref[...],
                preferred_element_type=jnp.float32)                      # (N, Cp)
    y = y + bias_ref[1:2, :Cp]

    # Dropout == identity in eval mode.
    o_ref[...] = y.astype(o_ref.dtype)


def prepare_params(params):
    """One-time packing: cast weights to bf16, zero-pad W2/b2 to a lane-dense
    (multiple of 128) output width, pack both biases into a single array."""
    w1, b1, w2, b2 = params
    C_in, H = w1.shape
    C_out = w2.shape[1]
    Cp = max(LANE, ((C_out + LANE - 1) // LANE) * LANE)

    w2p = jnp.zeros((H, Cp), jnp.float32).at[:, :C_out].set(w2)
    bias = jnp.zeros((2, max(H, Cp)), jnp.float32)
    bias = bias.at[0, :H].set(b1).at[1, :C_out].set(b2)
    return (w1.astype(jnp.bfloat16), w2p.astype(jnp.bfloat16), bias)


def feedforward_forward(x, prep):
    w1, w2p, bias = prep
    B, T, C = x.shape
    N = B * T
    H = w1.shape[1]
    Cp = w2p.shape[1]

    xf = x.reshape(N, C)   # fold batch+seq into the row/sublane dimension

    y = pl.pallas_call(
        ffn_kernel,
        out_shape=jax.ShapeDtypeStruct((N, Cp), x.dtype),
        grid=(1,),                                  # single grid step: no per-step overhead
        in_specs=[
            pl.BlockSpec((N, C), lambda i: (0, 0)),          # activations
            pl.BlockSpec((C, H), lambda i: (0, 0)),          # W1 (in, out), bf16
            pl.BlockSpec((H, Cp), lambda i: (0, 0)),         # W2 padded, bf16
            pl.BlockSpec((2, max(H, Cp)), lambda i: (0, 0)), # packed biases
        ],
        out_specs=pl.BlockSpec((N, Cp), lambda i: (0, 0)),   # lane-dense (Cp = 128) output
        compiler_params=pltpu.CompilerParams(
            dimension_semantics=("arbitrary",)),             # tiny: keep on one TensorCore
    )(xf, w1, w2p, bias)

    return y[:, :C].reshape(B, T, C)


# ---------------- pure-JAX reference (matches kernel numerics: bf16 matmuls) ----
def feedforward_reference(x, params):
    w1, b1, w2, b2 = params
    B, T, C = x.shape
    xf = x.reshape(B * T, C).astype(jnp.bfloat16)
    h = jnp.dot(xf, w1.astype(jnp.bfloat16),
                preferred_element_type=jnp.float32) + b1
    h = jnp.maximum(h, 0.0)
    y = jnp.dot(h.astype(jnp.bfloat16), w2.astype(jnp.bfloat16),
                preferred_element_type=jnp.float32) + b2
    return y.reshape(B, T, C)


def init_params(key):
    ks = jax.random.split(key, 4)
    s = 0.02
    C, H = EMBD_DIM, HIDDEN_DIM
    w1 = s * jax.random.normal(ks[0], (C, H), jnp.float32)   # Linear(embd, hidden), stored (in, out)
    b1 = s * jax.random.normal(ks[1], (H,), jnp.float32)
    w2 = s * jax.random.normal(ks[2], (H, C), jnp.float32)   # Linear(hidden, embd), stored (in, out)
    b2 = s * jax.random.normal(ks[3], (C,), jnp.float32)
    return (w1, b1, w2, b2)


if __name__ == "__main__":
    key = jax.random.PRNGKey(0)
    kx, kp = jax.random.split(key)

    B, T, C = BATCH, SEQ_LEN, EMBD_DIM
    x = jax.random.normal(kx, (B, T, C), jnp.float32)
    params = init_params(kp)
    prep = prepare_params(params)

    out = jax.block_until_ready(feedforward_forward(x, prep))
    ref = feedforward_reference(x, params)

    assert out.shape == (B, T, C)
    max_err = float(jnp.max(jnp.abs(out - ref)))
    assert jnp.allclose(out, ref, atol=2e-3, rtol=2e-3), max_err

    print("KERNEL_OK")
</pallas_src>

<mosaic_0001>
module attributes {stable_mosaic.version = 11 : i64} {
  func.func @ffn_kernel(%arg0: i32, %arg1: memref<16x32xf32, #tpu.memory_space<vmem>>, %arg2: memref<32x128xbf16, #tpu.memory_space<vmem>>, %arg3: memref<128x128xbf16, #tpu.memory_space<vmem>>, %arg4: memref<2x128xf32, #tpu.memory_space<vmem>>, %arg5: memref<16x128xf32, #tpu.memory_space<vmem>>) attributes {dimension_semantics = [#tpu.dimension_semantics<arbitrary>], iteration_bounds = array<i64: 1>, scalar_prefetch = 0 : i64, scratch_operands = 0 : i64, tpu.core_type = #tpu.core_type<tc>, window_params = [{pipeline_mode = #tpu.pipeline_mode<synchronous>, transform_indices = @transform_0, window_bounds = array<i64: 16, 32>}, {pipeline_mode = #tpu.pipeline_mode<synchronous>, transform_indices = @transform_1, window_bounds = array<i64: 32, 128>}, {pipeline_mode = #tpu.pipeline_mode<synchronous>, transform_indices = @transform_2, window_bounds = array<i64: 128, 128>}, {pipeline_mode = #tpu.pipeline_mode<synchronous>, transform_indices = @transform_3, window_bounds = array<i64: 2, 128>}, {pipeline_mode = #tpu.pipeline_mode<synchronous>, transform_indices = @transform_4, window_bounds = array<i64: 16, 128>}]} {
    %c0 = arith.constant 0 : index
    %c0_0 = arith.constant 0 : index
    %0 = vector.load %arg1[%c0, %c0_0] : memref<16x32xf32, #tpu.memory_space<vmem>>, vector<16x32xf32>
    %1 = arith.truncf %0 : vector<16x32xf32> to vector<16x32xbf16>
    %c0_1 = arith.constant 0 : index
    %c0_2 = arith.constant 0 : index
    %2 = vector.load %arg2[%c0_1, %c0_2] : memref<32x128xbf16, #tpu.memory_space<vmem>>, vector<32x128xbf16>
    %cst = arith.constant dense<0.000000e+00> : vector<16x128xf32>
    %3 = tpu.matmul %1, %2, %cst {dimension_numbers = #tpu.dot_dimension_numbers<[1], [0], [0], [1], [0, 0, 1, 1], [], []>} : vector<16x32xbf16>, vector<32x128xbf16>, vector<16x128xf32> -> vector<16x128xf32>
    %c0_3 = arith.constant 0 : index
    %c0_4 = arith.constant 0 : index
    %4 = vector.load %arg4[%c0_3, %c0_4] : memref<2x128xf32, #tpu.memory_space<vmem>>, vector<1x128xf32>
    %5 = vector.broadcast %4 : vector<1x128xf32> to vector<16x128xf32>
    %6 = arith.addf %3, %5 : vector<16x128xf32>
    %cst_5 = arith.constant 0.000000e+00 : f32
    %7 = vector.broadcast %cst_5 : f32 to vector<16x128xf32>
    %8 = arith.maximumf %6, %7 : vector<16x128xf32>
    %9 = arith.truncf %8 : vector<16x128xf32> to vector<16x128xbf16>
    %c0_6 = arith.constant 0 : index
    %c0_7 = arith.constant 0 : index
    %10 = vector.load %arg3[%c0_6, %c0_7] : memref<128x128xbf16, #tpu.memory_space<vmem>>, vector<128x128xbf16>
    %cst_8 = arith.constant dense<0.000000e+00> : vector<16x128xf32>
    %11 = tpu.matmul %9, %10, %cst_8 {dimension_numbers = #tpu.dot_dimension_numbers<[1], [0], [0], [1], [0, 0, 1, 1], [], []>} : vector<16x128xbf16>, vector<128x128xbf16>, vector<16x128xf32> -> vector<16x128xf32>
    %c1 = arith.constant 1 : index
    %c0_9 = arith.constant 0 : index
    %12 = vector.load %arg4[%c1, %c0_9] : memref<2x128xf32, #tpu.memory_space<vmem>>, vector<1x128xf32>
    %13 = vector.broadcast %12 : vector<1x128xf32> to vector<16x128xf32>
    %14 = arith.addf %11, %13 : vector<16x128xf32>
    %c0_10 = arith.constant 0 : index
    %c0_11 = arith.constant 0 : index
    %15 = vector.load %arg5[%c0_10, %c0_11] : memref<16x128xf32, #tpu.memory_space<vmem>>, vector<16x128xf32>
    tpu.vector_store %arg5[%c0_10, %c0_11], %14 {strides = array<i32>} : memref<16x128xf32, #tpu.memory_space<vmem>>, vector<16x128xf32>,
    return
  }
  func.func @transform_0(%arg0: i32) -> (i32, i32) {
    %c0_i32 = arith.constant 0 : i32
    %c0_i32_0 = arith.constant 0 : i32
    %c0_i32_1 = arith.constant 0 : i32
    return %c0_i32, %c0_i32_0 : i32, i32
  }
  func.func @transform_1(%arg0: i32) -> (i32, i32) {
    %c0_i32 = arith.constant 0 : i32
    %c0_i32_0 = arith.constant 0 : i32
    %c0_i32_1 = arith.constant 0 : i32
    return %c0_i32, %c0_i32_0 : i32, i32
  }
  func.func @transform_2(%arg0: i32) -> (i32, i32) {
    %c0_i32 = arith.constant 0 : i32
    %c0_i32_0 = arith.constant 0 : i32
    %c0_i32_1 = arith.constant 0 : i32
    return %c0_i32, %c0_i32_0 : i32, i32
  }
  func.func @transform_3(%arg0: i32) -> (i32, i32) {
    %c0_i32 = arith.constant 0 : i32
    %c0_i32_0 = arith.constant 0 : i32
    %c0_i32_1 = arith.constant 0 : i32
    return %c0_i32, %c0_i32_0 : i32, i32
  }
  func.func @transform_4(%arg0: i32) -> (i32, i32) {
    %c0_i32 = arith.constant 0 : i32
    %c0_i32_0 = arith.constant 0 : i32
    %c0_i32_1 = arith.constant 0 : i32
    return %c0_i32, %c0_i32_0 : i32, i32
  }
}

</mosaic_0001>

<llo_original>
// kernel: tpu_custom_call.1
$region0: #{tpu_custom_call.1}
  #allocation0 [shape = 'u32[]', space=smem, size = 0x4, offset = 0x4, fixed_abs, tag = 'smem constant byte address 0x4 - core index']
  #allocation1 [shape = 'u32[72,128]{1,0:T(1,128)}', space=vmem, size = 0x9000, scoped, tag = 'internal scratch']
  %s0 = inlined_call_operand.hbm [shape: f32[16,32], index: 0, kind: input, shape index: {}]
  %s1 = inlined_call_operand.hbm [shape: bf16[32,128], index: 1, kind: input, shape index: {}]
  %s2 = inlined_call_operand.hbm [shape: bf16[128,128], index: 2, kind: input, shape index: {}]
  %s3 = inlined_call_operand.vmem [shape: f32[2,128], index: 3, kind: input, shape index: {}]
  %s4 = inlined_call_operand.hbm [shape: f32[16,128], index: 4, kind: output, shape index: {}]
  %s5 = sld [smem:[#allocation0]]
  $region38: #{tpu_custom_call.1} parent=0
    _
  %s7 = ssub.s32 1, %s5
  %s8 = scalar_select 0, %s7, %s5
  $region1: #{tpu_custom_call.1} parent=0
    #allocation2 [shape = 'u8[8192]{0}', space=vmem, size = 0x2000, scoped, tag = 'input window, operand 0, single buffered']
    #allocation3 [shape = 's32[1]{0}', space=sflag, size = 0x4, scoped, tag = 'scoped memory for tpu_custom_call.1']
    #allocation4 [shape = 's32[1]{0}', space=sflag, size = 0x4, scoped, tag = 'scoped memory for tpu_custom_call.1']
    #allocation5 [shape = 'u8[8192]{0}', space=vmem, size = 0x2000, scoped, tag = 'input window, operand 1, single buffered']
    #allocation6 [shape = 's32[1]{0}', space=sflag, size = 0x4, scoped, tag = 'scoped memory for tpu_custom_call.1']
    #allocation7 [shape = 'u8[32768]{0}', space=vmem, size = 0x8000, scoped, tag = 'input window, operand 2, single buffered']
    #allocation8 [shape = 'u8[8192]{0}', space=vmem, size = 0x2000, scoped, tag = 'output window, operand 0, single buffered']
    %9 = vsyncpa [#allocation3], 0
    %10 = vsyncpa [#allocation6], 0
    %11 = vsyncpa [#allocation4], 0
    // Predicated region
    $region2: #{tpu_custom_call.1} parent=1 // pred_check
      _
    $region3: #{tpu_custom_call.1} parent=1 // pred_check_branch
      %13 = sbr.rel (0) target = $region5
    $region4: #{tpu_custom_call.1} parent=1 // pred_region
      %15 = vsyncadd [#allocation3], 0
      %s16 = sshll.u32 %s0, 4
      %s17 = int_to_ptr.hbm [resolvable:$true] %s16
      %s18 = sshll.u32 [#allocation2], 4
      %s19 = int_to_ptr.vmem [resolvable:$true] %s18
      %24 = dma.hbm_to_vmem [thread:$0]  %s17, 256, %s19, [#allocation3], 128, 128, 8
    $region5: #{tpu_custom_call.1} parent=1 // pred_fallthru
      _
    // Predicated region
    $region6: #{tpu_custom_call.1} parent=1 // pred_check
      _
    $region7: #{tpu_custom_call.1} parent=1 // pred_check_branch
      %26 = sbr.rel (0) target = $region9
    $region8: #{tpu_custom_call.1} parent=1 // pred_region
      %28 = vsyncadd [#allocation6], 0
      %s29 = sshll.u32 %s1, 4
      %s30 = int_to_ptr.hbm [resolvable:$true] %s29
      %s31 = sshll.u32 [#allocation5], 4
      %s32 = int_to_ptr.vmem [resolvable:$true] %s31
      %37 = dma.hbm_to_vmem [thread:$0]  %s30, 256, %s32, [#allocation6], 64, 64, 4
    $region9: #{tpu_custom_call.1} parent=1 // pred_fallthru
      _
    // Predicated region
    $region10: #{tpu_custom_call.1} parent=1 // pred_check
      _
    $region11: #{tpu_custom_call.1} parent=1 // pred_check_branch
      %39 = sbr.rel (0) target = $region13
    $region12: #{tpu_custom_call.1} parent=1 // pred_region
      %41 = vsyncadd [#allocation6], 0
      %s42 = sshll.u32 %s2, 4
      %s43 = int_to_ptr.hbm [resolvable:$true] %s42
      %s44 = sshll.u32 [#allocation7], 4
      %s45 = int_to_ptr.vmem [resolvable:$true] %s44
      %50 = dma.hbm_to_vmem [thread:$0]  %s43, 1024, %s45, [#allocation6], 64, 64, 4
    $region13: #{tpu_custom_call.1} parent=1 // pred_fallthru
      _
    // Predicated region
    $region14: #{tpu_custom_call.1} parent=1 // pred_check
      _
    $region15: #{tpu_custom_call.1} parent=1 // pred_check_branch
      %52 = sbr.rel (0) target = $region17
    $region16: #{tpu_custom_call.1} parent=1 // pred_region
      _
    $region17: #{tpu_custom_call.1} parent=1 // pred_fallthru
      _
    // Predicated region
    $region18: #{tpu_custom_call.1} parent=1 // pred_check
      _
    $region19: #{tpu_custom_call.1} parent=1 // pred_check_branch
      %54 = sbr.rel (0) target = $region21
    $region20: #{tpu_custom_call.1} parent=1 // pred_region
      %56 = dma.done [#allocation3], 256
    $region21: #{tpu_custom_call.1} parent=1 // pred_fallthru
      _
    // Predicated region
    $region22: #{tpu_custom_call.1} parent=1 // pred_check
      _
    $region23: #{tpu_custom_call.1} parent=1 // pred_check_branch
      %58 = sbr.rel (0) target = $region25
    $region24: #{tpu_custom_call.1} parent=1 // pred_region
      %60 = dma.done [#allocation6], 256
    $region25: #{tpu_custom_call.1} parent=1 // pred_fallthru
      _
    // Predicated region
    $region26: #{tpu_custom_call.1} parent=1 // pred_check
      _
    $region27: #{tpu_custom_call.1} parent=1 // pred_check_branch
      %62 = sbr.rel (0) target = $region29
    $region28: #{tpu_custom_call.1} parent=1 // pred_region
      %64 = dma.done [#allocation6], 1024
    $region29: #{tpu_custom_call.1} parent=1 // pred_fallthru
      _
    %v66 = vld [vmem:[#allocation2] sm:$0xff]
    %v67 = vld [vmem:[#allocation2 + $0x8] sm:$0xff]
    %v68 = vpack.c.bf16 %v67, %v66
    %v69 = vld [vmem:[#allocation5] sm:$0xf]
    %v70 = vld [vmem:[#allocation5 + $0x4] sm:$0xf]
    %v71 = vld [vmem:[#allocation5 + $0x8] sm:$0xf]
    %v72 = vld [vmem:[#allocation5 + $0xc] sm:$0xf]
    %v73 = vld [vmem:[%s3] sm:$0x1]
    %v74 = vperm.slane %v73, 0
    %v79 = vunpack.c.l.b16 %v69
    %v80 = vunpack.c.l.b16 %v70
    %v81 = vunpack.c.l.b16 %v71
    %v82 = vunpack.c.l.b16 %v72
    %v83 = vpack.c.b16 %v80, %v79
    %v84 = vpack.c.b16 %v82, %v81
    %vm87 = vcmask 261120
    %v89 = vsel %vm87, %v68, 0
    %91 = vmatpush.bf16.msra.mxu0 0
    %92 = vmatpush.bf16.msra.mxu0 0
    %93 = vmatpush.bf16.msra.mxu0 0
    %94 = vmatpush.bf16.msra.mxu0 0
    %95 = vmatpush.bf16.msra.mxu0 0
    %96 = vmatpush.bf16.msra.mxu0 0
    %97 = vmatpush.bf16.msra.mxu0 %v84
    %98 = vmatpush.bf16.msra.mxu0 %v83
    %99 = vmatmul.bf16.gmra.mxu0 %v89
    %v100 = vpop.f32.mrf.mxu0
    %v101 = vadd.f32 %v74, %v100
    %v102 = vpop.f32.mrf.mxu0
    %v103 = vadd.f32 %v74, %v102
    %104 = vdwg.mxu0
    %v105 = vmax.f32 %v101, 0.0
    %v106 = vmax.f32 %v103, 0.0
    %v107 = vpack.c.bf16 %v106, %v105
    %v108 = vld [vmem:[#allocation7] sm:$0xf]
    %v109 = vld [vmem:[#allocation7 + $0x4] sm:$0xf]
    %v110 = vld [vmem:[#allocation7 + $0x8] sm:$0xf]
    %v111 = vld [vmem:[#allocation7 + $0xc] sm:$0xf]
    %v112 = vld [vmem:[#allocation7 + $0x10] sm:$0xf]
    %v113 = vld [vmem:[#allocation7 + $0x14] sm:$0xf]
    %v114 = vld [vmem:[#allocation7 + $0x18] sm:$0xf]
    %v115 = vld [vmem:[#allocation7 + $0x1c] sm:$0xf]
    %v116 = vld [vmem:[#allocation7 + $0x20] sm:$0xf]
    %v117 = vld [vmem:[#allocation7 + $0x24] sm:$0xf]
    %v118 = vld [vmem:[#allocation7 + $0x28] sm:$0xf]
    %v119 = vld [vmem:[#allocation7 + $0x2c] sm:$0xf]
    %v120 = vld [vmem:[#allocation7 + $0x30] sm:$0xf]
    %v121 = vld [vmem:[#allocation7 + $0x34] sm:$0xf]
    %v122 = vld [vmem:[#allocation7 + $0x38] sm:$0xf]
    %v123 = vld [vmem:[#allocation7 + $0x3c] sm:$0xf]
    %v124 = vld [vmem:[%s3 + $0x1] sm:$0x1]
    %v125 = vperm.slane %v124, 0
    %v142 = vunpack.c.l.b16 %v108
    %v143 = vunpack.c.l.b16 %v109
    %v144 = vunpack.c.l.b16 %v110
    %v145 = vunpack.c.l.b16 %v111
    %v146 = vunpack.c.l.b16 %v112
    %v147 = vunpack.c.l.b16 %v113
    %v148 = vunpack.c.l.b16 %v114
    %v149 = vunpack.c.l.b16 %v115
    %v150 = vunpack.c.l.b16 %v116
    %v151 = vunpack.c.l.b16 %v117
    %v152 = vunpack.c.l.b16 %v118
    %v153 = vunpack.c.l.b16 %v119
    %v154 = vunpack.c.l.b16 %v120
    %v155 = vunpack.c.l.b16 %v121
    %v156 = vunpack.c.l.b16 %v122
    %v157 = vunpack.c.l.b16 %v123
    %v158 = vpack.c.b16 %v143, %v142
    %v159 = vpack.c.b16 %v145, %v144
    %v160 = vpack.c.b16 %v147, %v146
    %v161 = vpack.c.b16 %v149, %v148
    %v162 = vpack.c.b16 %v151, %v150
    %v163 = vpack.c.b16 %v153, %v152
    %v164 = vpack.c.b16 %v155, %v154
    %v165 = vpack.c.b16 %v157, %v156
    %174 = vmatpush.bf16.msra.mxu0 %v165
    %175 = vmatpush.bf16.msra.mxu0 %v164
    %176 = vmatpush.bf16.msra.mxu0 %v163
    %177 = vmatpush.bf16.msra.mxu0 %v162
    %178 = vmatpush.bf16.msra.mxu0 %v161
    %179 = vmatpush.bf16.msra.mxu0 %v160
    %180 = vmatpush.bf16.msra.mxu0 %v159
    %181 = vmatpush.bf16.msra.mxu0 %v158
    %182 = vmatmul.bf16.gmra.mxu0 %v107
    %v183 = vpop.f32.mrf.mxu0
    %v184 = vadd.f32 %v125, %v183
    %v185 = vpop.f32.mrf.mxu0
    %v186 = vadd.f32 %v125, %v185
    %187 = vdwg.mxu0
    %188 = vst [vmem:[#allocation8] sm:$0xff] %v184
    %189 = vst [vmem:[#allocation8 + $0x8] sm:$0xff] %v186
    // Predicated region
    $region30: #{tpu_custom_call.1} parent=1 // pred_check
      _
    $region31: #{tpu_custom_call.1} parent=1 // pred_check_branch
      %191 = sbr.rel (0) target = $region33
    $region32: #{tpu_custom_call.1} parent=1 // pred_region
      %193 = vsyncadd [#allocation4], 0
      %s194 = sshll.u32 [#allocation8], 4
      %s195 = int_to_ptr.vmem [resolvable:$true] %s194
      %s196 = sshll.u32 %s4, 4
      %s197 = int_to_ptr.hbm [resolvable:$true] %s196
      %202 = dma.vmem_to_hbm [thread:$0]  %s195, 256, %s197, [#allocation4], 128, 128, 8
    $region33: #{tpu_custom_call.1} parent=1 // pred_fallthru
      _
    // Predicated region
    $region34: #{tpu_custom_call.1} parent=1 // pred_check
      _
    $region35: #{tpu_custom_call.1} parent=1 // pred_check_branch
      %204 = sbr.rel (0) target = $region37
    $region36: #{tpu_custom_call.1} parent=1 // pred_region
      %206 = dma.done [#allocation4], 256
    $region37: #{tpu_custom_call.1} parent=1 // pred_fallthru
      _
    %207 = vsyncpa [#allocation3], 1
    %208 = vsyncpa [#allocation6], 1
    %209 = vsyncpa [#allocation4], 1

</llo_original>
